<compile_context>
chip_gen: v7x
topology: tpu7x:2x2x1
jax: 0.10.0
libtpu: 0.0.40
codegen_flags: <defaults>
</compile_context>

<pallas_src>
import functools
import math

import jax
import jax.numpy as jnp
from jax.experimental import pallas as pl
from jax.experimental.pallas import tpu as pltpu

_LANE = 128
_SUBLANE = 8
_MIB = 1024 * 1024


def _round_up(x, m):
    return ((x + m - 1) // m) * m


# ---------------------------------------------------------------------------
# Hardware / capability queries (cached, warmed up eagerly before any jit trace).
# ---------------------------------------------------------------------------
@functools.lru_cache(maxsize=1)
def _vmem_capacity_bytes():
    try:
        info = pltpu.get_tpu_info()
        cap = getattr(info, "vmem_capacity_bytes", None)
        if cap:
            return int(cap)
    except Exception:
        pass
    return 64 * _MIB  # conservative: v7x per-TensorCore VMEM


@functools.lru_cache(maxsize=1)
def _default_block_m():
    try:
        kind = jax.devices()[0].device_kind.lower()
    except Exception:
        kind = ""
    # v6e/v7x MXUs are 256 wide; keep 128 on v5e and older chips.
    if "v5" in kind or "v4" in kind or "v3" in kind or "v2" in kind:
        return 128
    return 256


@functools.lru_cache(maxsize=1)
def _single_buffer_supported():
    """Probe (once, eagerly) whether pipeline_mode=pl.Buffered(1) compiles+runs."""
    try:
        def k(x_ref, w_ref, o_ref):
            o_ref[...] = jnp.dot(x_ref[...], w_ref[...],
                                 preferred_element_type=jnp.float32)

        x = jnp.ones((16, 128), jnp.float32)
        w = jnp.ones((128, 128), jnp.float32)
        out = pl.pallas_call(
            k,
            out_shape=jax.ShapeDtypeStruct((16, 128), jnp.float32),
            grid=(2,),
            in_specs=[
                pl.BlockSpec((8, 128), lambda i: (i, 0)),
                pl.BlockSpec((128, 128), lambda i: (0, 0),
                             pipeline_mode=pl.Buffered(1)),
            ],
            out_specs=pl.BlockSpec((8, 128), lambda i: (i, 0)),
        )(x, w)
        jax.block_until_ready(out)
        return True
    except Exception:
        return False


def _const_spec(shape, single_buffer):
    """BlockSpec for a grid-invariant (VMEM-resident) operand."""
    idx = lambda *_: (0,) * len(shape)
    if single_buffer:
        return pl.BlockSpec(shape, idx, pipeline_mode=pl.Buffered(1))
    return pl.BlockSpec(shape, idx)


# ---------------------------------------------------------------------------
# Kernels
# ---------------------------------------------------------------------------
def _fused_kernel(num_layers, apply_mask, *refs):
    """refs = (x_ref, [mask_ref,] w0, b0, w1, b1, ..., o_ref).  Whole stack fused."""
    if apply_mask:
        x_ref, mask_ref = refs[0], refs[1]
        params = refs[2:-1]
    else:
        x_ref, mask_ref = refs[0], None
        params = refs[1:-1]
    o_ref = refs[-1]

    act_dtype = x_ref.dtype
    h = x_ref[...]
    if apply_mask:
        m = mask_ref[...].astype(jnp.float32)  # (TM, 1), broadcasts over features

    # TODO(synk): for hidden dims >= ~2048, chunk each layer's N dimension and stage
    # `h` in an explicit VMEM scratch to bound the f32 accumulator live range.
    for i in range(num_layers):
        w_ref = params[2 * i]
        b_ref = params[2 * i + 1]
        acc = jnp.dot(h, w_ref[...], preferred_element_type=jnp.float32)
        acc = acc + b_ref[...].astype(jnp.float32)      # (1, Dout) broadcast
        if apply_mask:
            acc = acc * m
        acc = jnp.maximum(acc, 0.0)
        if i == num_layers - 1:
            o_ref[...] = acc.astype(o_ref.dtype)
        else:
            h = acc.astype(act_dtype)                   # bf16 stays bf16 for MXU


def _layer_kernel(apply_mask, *refs):
    """Streamed single layer: K/N-tiled matmul with f32 acc + bias/mask/relu epilogue."""
    if apply_mask:
        x_ref, mask_ref, w_ref, b_ref, o_ref, acc_ref = refs
    else:
        x_ref, w_ref, b_ref, o_ref, acc_ref = refs
        mask_ref = None
    k = pl.program_id(2)

    @pl.when(k == 0)
    def _():
        acc_ref[...] = jnp.zeros_like(acc_ref)

    acc_ref[...] += jnp.dot(x_ref[...], w_ref[...],
                            preferred_element_type=jnp.float32)

    @pl.when(k == pl.num_programs(2) - 1)
    def _():
        acc = acc_ref[...] + b_ref[...].astype(jnp.float32)
        if apply_mask:
            acc = acc * mask_ref[...].astype(jnp.float32)
        acc = jnp.maximum(acc, 0.0)
        o_ref[...] = acc.astype(o_ref.dtype)


def _linear_relu_tiled(xp, wp, bp, mp, apply_mask, tm, vmem_cap):
    """One streamed layer on padded operands: out = relu((xp @ wp + bp) * mp)."""
    Bp, Kp = xp.shape
    Np = wp.shape[1]
    itemsize = xp.dtype.itemsize
    tn = max(t for t in (512, 384, 256, 128) if Np % t == 0)
    tk = max(t for t in (512, 384, 256, 128) if Kp % t == 0)
    grid = (Bp // tm, Np // tn, Kp // tk)

    args = [xp]
    in_specs = [pl.BlockSpec((tm, tk), lambda i, j, k: (i, k))]
    if apply_mask:
        args.append(mp)
        in_specs.append(pl.BlockSpec((tm, 1), lambda i, j, k: (i, 0)))
    args += [wp, bp]
    in_specs += [pl.BlockSpec((tk, tn), lambda i, j, k: (k, j)),
                 pl.BlockSpec((1, tn), lambda i, j, k: (0, j))]

    vmem_limit = min(
        vmem_cap,
        2 * (tm * tk + tk * tn + tm * tn) * itemsize
        + 2 * tn * 4
        + (2 * tm * _LANE * 4 if apply_mask else 0)
        + tm * tn * 4
        + 8 * _MIB)

    return pl.pallas_call(
        functools.partial(_layer_kernel, apply_mask),
        out_shape=jax.ShapeDtypeStruct((Bp, Np), xp.dtype),
        grid=grid,
        in_specs=in_specs,
        out_specs=pl.BlockSpec((tm, tn), lambda i, j, k: (i, j)),
        scratch_shapes=[pltpu.VMEM((tm, tn), jnp.float32)],
        compiler_params=pltpu.CompilerParams(
            dimension_semantics=("parallel", "parallel", "arbitrary"),
            vmem_limit_bytes=int(vmem_limit)),
        cost_estimate=pl.CostEstimate(
            flops=2 * Bp * Kp * Np, transcendentals=0,
            bytes_accessed=int((Bp * Kp + Kp * Np + Bp * Np) * itemsize + Np * 4)),
    )(*args)


# ---------------------------------------------------------------------------
# Jitted forward on pre-padded parameters.
# ---------------------------------------------------------------------------
@functools.partial(
    jax.jit,
    static_argnames=("dims", "compute_dtype", "block_m", "force_streaming"))
def _mlp_forward(x, padded_ws, padded_bs, mask, *, dims, compute_dtype,
                 block_m, force_streaming):
    compute_dtype = jnp.dtype(compute_dtype)
    itemsize = compute_dtype.itemsize
    num_layers = len(padded_ws)
    B = x.shape[0]
    Din = dims[0]
    out_dim = dims[-1]
    apply_mask = mask is not None

    pdims = [pw.shape[0] for pw in padded_ws] + [padded_ws[-1].shape[1]]
    max_pdim = max(pdims)

    # --- VMEM accounting -----------------------------------------------------
    w_bytes = sum(pw.shape[0] * pw.shape[1] for pw in padded_ws) * itemsize
    b_bytes = sum(pb.shape[1] for pb in padded_bs) * 4
    single_buf = _single_buffer_supported()
    wfactor = 1 if single_buf else 2
    resident_param_bytes = wfactor * (w_bytes + b_bytes)

    vmem_cap = _vmem_capacity_bytes()
    budget = int(vmem_cap * 0.75)
    slack = 2 * _MIB

    def act_bytes(t):
        b = 2 * t * pdims[0] * itemsize        # double-buffered input tile
        b += 2 * t * pdims[-1] * itemsize      # double-buffered output tile
        if apply_mask:
            b += 2 * t * _LANE * 4             # mask tile (lane-padded layout)
        b += t * max_pdim * (4 + itemsize)     # f32 acc + intermediate h working set
        return b

    # --- choose batch tile & execution path ----------------------------------
    tm_pref = block_m if block_m is not None else _default_block_m()
    tm_cap = _round_up(B, _SUBLANE)
    tm = max(_SUBLANE, _round_up(min(tm_pref, tm_cap), _SUBLANE))

    use_streaming = bool(force_streaming)
    if not use_streaming:
        t = tm
        while t > _SUBLANE and resident_param_bytes + act_bytes(t) + slack > budget:
            t = max(_SUBLANE, _round_up(t // 2, _SUBLANE))
        if resident_param_bytes + act_bytes(t) + slack > budget:
            use_streaming = True   # weights can't stay VMEM-resident (e.g. v7x 64 MiB)
        else:
            tm = t

    Bp = _round_up(B, tm)

    # --- pad activations / mask (fused by the surrounding jit) ---------------
    xp = jnp.zeros((Bp, pdims[0]), compute_dtype)
    xp = xp.at[:B, :Din].set(x.astype(compute_dtype))
    mp = None
    if apply_mask:
        mp = jnp.zeros((Bp, 1), jnp.float32).at[:B, 0].set(mask.astype(jnp.float32))

    if use_streaming:
        # TODO(synk): stream per-layer weights with a manual double-buffered DMA
        # inside one fused kernel (would also hide the weight load when grid == 1).
        h = xp
        for wp, bp in zip(padded_ws, padded_bs):
            h = _linear_relu_tiled(h, wp.astype(compute_dtype), bp, mp,
                                   apply_mask, tm, vmem_cap)
        return h[:B, :out_dim]

    # --- fused all-resident path ---------------------------------------------
    call_args = [xp]
    in_specs = [pl.BlockSpec((tm, pdims[0]), lambda i: (i, 0))]
    if apply_mask:
        call_args.append(mp)
        in_specs.append(pl.BlockSpec((tm, 1), lambda i: (i, 0)))
    for wp, bp in zip(padded_ws, padded_bs):
        call_args += [wp.astype(compute_dtype), bp]   # bias stays f32
        in_specs += [_const_spec(wp.shape, single_buf),
                     _const_spec(bp.shape, single_buf)]

    grid_m = Bp // tm
    # Megacore: shard the batch axis only when there are >= 2 real tiles of compute;
    # at small batch the kernel is weight-DMA bound and sharding would double HBM
    # weight traffic on v7x's two TensorCores.
    parallel = grid_m >= 2 and B >= 128
    semantics = ("parallel",) if parallel else ("arbitrary",)

    vmem_limit = min(vmem_cap,
                     resident_param_bytes + act_bytes(tm) + 8 * _MIB)

    flops = 2 * Bp * sum(pdims[i] * pdims[i + 1] for i in range(num_layers))
    bytes_accessed = (Bp * pdims[0] * itemsize
                      + w_bytes + b_bytes
                      + Bp * pdims[-1] * itemsize
                      + (Bp * 4 if apply_mask else 0))

    out = pl.pallas_call(
        functools.partial(_fused_kernel, num_layers, apply_mask),
        out_shape=jax.ShapeDtypeStruct((Bp, pdims[-1]), compute_dtype),
        grid=(grid_m,),
        in_specs=in_specs,
        out_specs=pl.BlockSpec((tm, pdims[-1]), lambda i: (i, 0)),
        compiler_params=pltpu.CompilerParams(
            dimension_semantics=semantics,
            vmem_limit_bytes=int(vmem_limit)),
        cost_estimate=pl.CostEstimate(
            flops=int(flops), transcendentals=0, bytes_accessed=int(bytes_accessed)),
    )(*call_args)

    return out[:B, :out_dim]


# ---------------------------------------------------------------------------
# Module: JAX/Pallas re-implementation of the PyTorch MLP.
# ---------------------------------------------------------------------------
class MLP:
    def __init__(self, mlp_input_dim, output_dim, layers_dim=None, key=None):
        if layers_dim is None:
            layers_dim = []
        layers_dim = list(layers_dim) + [output_dim]
        self.num_mlp_layers = len(layers_dim)
        self.dims = (int(mlp_input_dim),) + tuple(int(d) for d in layers_dim)
        if key is None:
            key = jax.random.PRNGKey(0)

        self.weights, self.biases = [], []
        fan_in = mlp_input_dim
        for d in layers_dim:
            key, wk = jax.random.split(key)
            # kaiming_normal (fan_in mode, relu gain): std = sqrt(2 / fan_in)
            std = math.sqrt(2.0 / fan_in)
            w = jax.random.normal(wk, (fan_in, d), jnp.float32) * std  # (in, out)
            b = jnp.zeros((d,), jnp.float32)                           # ZeroInitializer
            self.weights.append(w)
            self.biases.append(b)
            fan_in = d

        # Pre-pad parameters ONCE (no per-call padding kernels / HBM rewrites).
        pdims = [_round_up(d, _LANE) for d in self.dims]
        self.padded_weights, self.padded_biases = [], []
        for li, (w, b) in enumerate(zip(self.weights, self.biases)):
            di, do = w.shape
            wp = jnp.zeros((pdims[li], pdims[li + 1]), jnp.float32).at[:di, :do].set(w)
            bp = jnp.zeros((1, pdims[li + 1]), jnp.float32).at[0, :do].set(b)
            self.padded_weights.append(wp)
            self.padded_biases.append(bp)

        # Warm capability / hardware caches eagerly (outside any jit trace).
        _single_buffer_supported()
        _vmem_capacity_bytes()
        _default_block_m()

    def __call__(self, h, length=None, compute_dtype=None, block_m=None,
                 force_streaming=False):
        if compute_dtype is None:
            compute_dtype = h.dtype
        return _mlp_forward(
            h, tuple(self.padded_weights), tuple(self.padded_biases), length,
            dims=self.dims,
            compute_dtype=str(jnp.dtype(compute_dtype)),
            block_m=block_m,
            force_streaming=bool(force_streaming))


def _reference_forward(mlp, h, length=None):
    # plain-JAX f32 reference (matches the PyTorch forward exactly)
    for w, b in zip(mlp.weights, mlp.biases):
        h = h @ w + b
        if length is not None:
            h = h * length[:, None]
        h = jnp.maximum(h, 0.0)
    return h


if __name__ == "__main__":
    key = jax.random.PRNGKey(0)
    k_x, k_len, k_params = jax.random.split(key, 3)

    batch = 8
    mlp_input_dim = 32
    layers_dim = [64]
    output_dim = 16

    x = jax.random.normal(k_x, (batch, mlp_input_dim), jnp.float32)
    length = jax.random.uniform(k_len, (batch,), jnp.float32)

    mlp = MLP(mlp_input_dim, output_dim, layers_dim=layers_dim, key=k_params)

    # f32 fused path with length mask (matches PyTorch semantics exactly)
    out = jax.block_until_ready(mlp(x, length=length))
    ref = _reference_forward(mlp, x, length=length)
    assert out.shape == (batch, output_dim)
    assert jnp.allclose(out, ref, atol=1e-5, rtol=1e-5)

    # length=None path
    out2 = jax.block_until_ready(mlp(x, length=None))
    ref2 = _reference_forward(mlp, x, length=None)
    assert jnp.allclose(out2, ref2, atol=1e-5, rtol=1e-5)

    # streamed (per-layer K/N-tiled) fallback path — exercised explicitly
    out3 = jax.block_until_ready(mlp(x, length=length, force_streaming=True))
    assert jnp.allclose(out3, ref, atol=1e-5, rtol=1e-5)

    # bf16 compute path (full MXU rate, f32 accumulation/epilogue) — loose check
    out_bf16 = jax.block_until_ready(mlp(x, length=length, compute_dtype=jnp.bfloat16))
    assert out_bf16.shape == (batch, output_dim)
    assert jnp.all(jnp.isfinite(out_bf16.astype(jnp.float32)))
    assert jnp.allclose(out_bf16.astype(jnp.float32), ref, atol=1e-1, rtol=1e-1)

    print("KERNEL_OK")
</pallas_src>

<mosaic_0001>
module attributes {stable_mosaic.version = 11 : i64} {
  func.func @k(%arg0: i32, %arg1: memref<8x128xf32, #tpu.memory_space<vmem>>, %arg2: memref<128x128xf32, #tpu.memory_space<vmem>>, %arg3: memref<8x128xf32, #tpu.memory_space<vmem>>) attributes {dimension_semantics = [#tpu.dimension_semantics<arbitrary>], iteration_bounds = array<i64: 2>, scalar_prefetch = 0 : i64, scratch_operands = 0 : i64, tpu.core_type = #tpu.core_type<tc>, window_params = [{transform_indices = @transform_0, window_bounds = array<i64: 8, 128>}, {pipeline_mode = #tpu.pipeline_mode<synchronous>, transform_indices = @transform_1, window_bounds = array<i64: 128, 128>}, {transform_indices = @transform_2, window_bounds = array<i64: 8, 128>}]} {
    %c0 = arith.constant 0 : index
    %c0_0 = arith.constant 0 : index
    %0 = vector.load %arg1[%c0, %c0_0] : memref<8x128xf32, #tpu.memory_space<vmem>>, vector<8x128xf32>
    %c0_1 = arith.constant 0 : index
    %c0_2 = arith.constant 0 : index
    %1 = vector.load %arg2[%c0_1, %c0_2] : memref<128x128xf32, #tpu.memory_space<vmem>>, vector<128x128xf32>
    %cst = arith.constant dense<0.000000e+00> : vector<8x128xf32>
    %2 = tpu.matmul %0, %1, %cst {dimension_numbers = #tpu.dot_dimension_numbers<[1], [0], [0], [1], [0, 0, 1, 1], [], []>} : vector<8x128xf32>, vector<128x128xf32>, vector<8x128xf32> -> vector<8x128xf32>
    %c0_3 = arith.constant 0 : index
    %c0_4 = arith.constant 0 : index
    %3 = vector.load %arg3[%c0_3, %c0_4] : memref<8x128xf32, #tpu.memory_space<vmem>>, vector<8x128xf32>
    tpu.vector_store %arg3[%c0_3, %c0_4], %2 {strides = array<i32>} : memref<8x128xf32, #tpu.memory_space<vmem>>, vector<8x128xf32>,
    return
  }
  func.func @transform_0(%arg0: i32) -> (i32, i32) {
    %c0_i32 = arith.constant 0 : i32
    %c0_i32_0 = arith.constant 0 : i32
    return %arg0, %c0_i32 : i32, i32
  }
  func.func @transform_1(%arg0: i32) -> (i32, i32) {
    %c0_i32 = arith.constant 0 : i32
    %c0_i32_0 = arith.constant 0 : i32
    %c0_i32_1 = arith.constant 0 : i32
    return %c0_i32, %c0_i32_0 : i32, i32
  }
  func.func @transform_2(%arg0: i32) -> (i32, i32) {
    %c0_i32 = arith.constant 0 : i32
    %c0_i32_0 = arith.constant 0 : i32
    return %arg0, %c0_i32 : i32, i32
  }
}

module attributes {stable_mosaic.version = 11 : i64} {
  func.func @_fused_kernel(%arg0: i32, %arg1: memref<8x128xf32, #tpu.memory_space<vmem>>, %arg2: memref<8x1xf32, #tpu.memory_space<vmem>>, %arg3: memref<128x128xf32, #tpu.memory_space<vmem>>, %arg4: memref<1x128xf32, #tpu.memory_space<vmem>>, %arg5: memref<128x128xf32, #tpu.memory_space<vmem>>, %arg6: memref<1x128xf32, #tpu.memory_space<vmem>>, %arg7: memref<8x128xf32, #tpu.memory_space<vmem>>) attributes {dimension_semantics = [#tpu.dimension_semantics<arbitrary>], iteration_bounds = array<i64: 1>, scalar_prefetch = 0 : i64, scratch_operands = 0 : i64, tpu.core_type = #tpu.core_type<tc>, window_params = [{transform_indices = @transform_0, window_bounds = array<i64: 8, 128>}, {transform_indices = @transform_1, window_bounds = array<i64: 8, 1>}, {pipeline_mode = #tpu.pipeline_mode<synchronous>, transform_indices = @transform_2, window_bounds = array<i64: 128, 128>}, {pipeline_mode = #tpu.pipeline_mode<synchronous>, transform_indices = @transform_3, window_bounds = array<i64: 1, 128>}, {pipeline_mode = #tpu.pipeline_mode<synchronous>, transform_indices = @transform_4, window_bounds = array<i64: 128, 128>}, {pipeline_mode = #tpu.pipeline_mode<synchronous>, transform_indices = @transform_5, window_bounds = array<i64: 1, 128>}, {transform_indices = @transform_6, window_bounds = array<i64: 8, 128>}]} {
    %c0 = arith.constant 0 : index
    %c0_0 = arith.constant 0 : index
    %0 = vector.load %arg1[%c0, %c0_0] : memref<8x128xf32, #tpu.memory_space<vmem>>, vector<8x128xf32>
    %c0_1 = arith.constant 0 : index
    %c0_2 = arith.constant 0 : index
    %1 = vector.load %arg2[%c0_1, %c0_2] : memref<8x1xf32, #tpu.memory_space<vmem>>, vector<8x1xf32>
    %c0_3 = arith.constant 0 : index
    %c0_4 = arith.constant 0 : index
    %2 = vector.load %arg3[%c0_3, %c0_4] : memref<128x128xf32, #tpu.memory_space<vmem>>, vector<128x128xf32>
    %cst = arith.constant dense<0.000000e+00> : vector<8x128xf32>
    %3 = tpu.matmul %0, %2, %cst {dimension_numbers = #tpu.dot_dimension_numbers<[1], [0], [0], [1], [0, 0, 1, 1], [], []>} : vector<8x128xf32>, vector<128x128xf32>, vector<8x128xf32> -> vector<8x128xf32>
    %c0_5 = arith.constant 0 : index
    %c0_6 = arith.constant 0 : index
    %4 = vector.load %arg4[%c0_5, %c0_6] : memref<1x128xf32, #tpu.memory_space<vmem>>, vector<1x128xf32>
    %5 = vector.broadcast %4 : vector<1x128xf32> to vector<8x128xf32>
    %6 = arith.addf %3, %5 : vector<8x128xf32>
    %7 = vector.broadcast %1 : vector<8x1xf32> to vector<8x128xf32>
    %8 = arith.mulf %6, %7 : vector<8x128xf32>
    %cst_7 = arith.constant 0.000000e+00 : f32
    %9 = vector.broadcast %cst_7 : f32 to vector<8x128xf32>
    %10 = arith.maximumf %8, %9 : vector<8x128xf32>
    %c0_8 = arith.constant 0 : index
    %c0_9 = arith.constant 0 : index
    %11 = vector.load %arg5[%c0_8, %c0_9] : memref<128x128xf32, #tpu.memory_space<vmem>>, vector<128x128xf32>
    %cst_10 = arith.constant dense<0.000000e+00> : vector<8x128xf32>
    %12 = tpu.matmul %10, %11, %cst_10 {dimension_numbers = #tpu.dot_dimension_numbers<[1], [0], [0], [1], [0, 0, 1, 1], [], []>} : vector<8x128xf32>, vector<128x128xf32>, vector<8x128xf32> -> vector<8x128xf32>
    %c0_11 = arith.constant 0 : index
    %c0_12 = arith.constant 0 : index
    %13 = vector.load %arg6[%c0_11, %c0_12] : memref<1x128xf32, #tpu.memory_space<vmem>>, vector<1x128xf32>
    %14 = vector.broadcast %13 : vector<1x128xf32> to vector<8x128xf32>
    %15 = arith.addf %12, %14 : vector<8x128xf32>
    %16 = vector.broadcast %1 : vector<8x1xf32> to vector<8x128xf32>
    %17 = arith.mulf %15, %16 : vector<8x128xf32>
    %cst_13 = arith.constant 0.000000e+00 : f32
    %18 = vector.broadcast %cst_13 : f32 to vector<8x128xf32>
    %19 = arith.maximumf %17, %18 : vector<8x128xf32>
    %c0_14 = arith.constant 0 : index
    %c0_15 = arith.constant 0 : index
    %20 = vector.load %arg7[%c0_14, %c0_15] : memref<8x128xf32, #tpu.memory_space<vmem>>, vector<8x128xf32>
    tpu.vector_store %arg7[%c0_14, %c0_15], %19 {strides = array<i32>} : memref<8x128xf32, #tpu.memory_space<vmem>>, vector<8x128xf32>,
    return
  }
  func.func @transform_0(%arg0: i32) -> (i32, i32) {
    %c0_i32 = arith.constant 0 : i32
    %c0_i32_0 = arith.constant 0 : i32
    return %arg0, %c0_i32 : i32, i32
  }
  func.func @transform_1(%arg0: i32) -> (i32, i32) {
    %c0_i32 = arith.constant 0 : i32
    %c0_i32_0 = arith.constant 0 : i32
    return %arg0, %c0_i32 : i32, i32
  }
  func.func @transform_2(%arg0: i32) -> (i32, i32) {
    %c0_i32 = arith.constant 0 : i32
    %c0_i32_0 = arith.constant 0 : i32
    %c0_i32_1 = arith.constant 0 : i32
    return %c0_i32, %c0_i32_0 : i32, i32
  }
  func.func @transform_3(%arg0: i32) -> (i32, i32) {
    %c0_i32 = arith.constant 0 : i32
    %c0_i32_0 = arith.constant 0 : i32
    %c0_i32_1 = arith.constant 0 : i32
    return %c0_i32, %c0_i32_0 : i32, i32
  }
  func.func @transform_4(%arg0: i32) -> (i32, i32) {
    %c0_i32 = arith.constant 0 : i32
    %c0_i32_0 = arith.constant 0 : i32
    %c0_i32_1 = arith.constant 0 : i32
    return %c0_i32, %c0_i32_0 : i32, i32
  }
  func.func @transform_5(%arg0: i32) -> (i32, i32) {
    %c0_i32 = arith.constant 0 : i32
    %c0_i32_0 = arith.constant 0 : i32
    %c0_i32_1 = arith.constant 0 : i32
    return %c0_i32, %c0_i32_0 : i32, i32
  }
  func.func @transform_6(%arg0: i32) -> (i32, i32) {
    %c0_i32 = arith.constant 0 : i32
    %c0_i32_0 = arith.constant 0 : i32
    return %arg0, %c0_i32 : i32, i32
  }
}

</mosaic_0001>

<llo_original>
// kernel: tpu_custom_call.1
$region0: #{tpu_custom_call.1}
  #allocation0 [shape = 'u32[]', space=smem, size = 0x4, offset = 0x4, fixed_abs, tag = 'smem constant byte address 0x4 - core index']
  #allocation1 [shape = 'u32[144,128]{1,0:T(1,128)}', space=vmem, size = 0x12000, scoped, tag = 'internal scratch']
  %s0 = inlined_call_operand.hbm [shape: f32[16,128], index: 0, kind: input, shape index: {}]
  %s1 = inlined_call_operand.hbm [shape: f32[128,128], index: 1, kind: input, shape index: {}]
  %s2 = inlined_call_operand.hbm [shape: f32[16,128], index: 2, kind: output, shape index: {}]
  %s3 = sld [smem:[#allocation0]]
  $region49: #{tpu_custom_call.1} parent=0
    _
  %s5 = ssub.s32 1, %s3
  %s6 = scalar_select 0, %s5, %s3
  $region1: #{tpu_custom_call.1} parent=0
    #allocation2 [shape = 'u8[8192]{0}', space=vmem, size = 0x2000, scoped, tag = 'input window, operand 0']
    #allocation3 [shape = 's32[2]{0}', space=sflag, size = 0x8, scoped, tag = 'scoped memory for tpu_custom_call.1']
    #allocation4 [shape = 's32[2]{0}', space=sflag, size = 0x8, scoped, tag = 'scoped memory for tpu_custom_call.1']
    #allocation5 [shape = 'u8[65536]{0}', space=vmem, size = 0x10000, scoped, tag = 'input window, operand 1, single buffered']
    #allocation6 [shape = 's32[1]{0}', space=sflag, size = 0x4, scoped, tag = 'scoped memory for tpu_custom_call.1']
    #allocation7 [shape = 'u8[8192]{0}', space=vmem, size = 0x2000, scoped, tag = 'output window, operand 0']
    %7 = vsyncpa [#allocation3], 0
    %s8 = scalar_lea.sflag [#allocation3], 1
    %9 = vsyncpa %s8, 0
    %10 = vsyncpa [#allocation6], 0
    %11 = vsyncpa [#allocation4], 0
    %s12 = scalar_lea.sflag [#allocation4], 1
    %13 = vsyncpa %s12, 0
    loop: start=0, step=1, limit=4
    $region2: #{tpu_custom_call.1} parent=1 // loop_pre_header
      _
    $region3: #{tpu_custom_call.1} parent=1 // loop_header
      %s15 = sphi 0, %s19
      %p16 = scmp.ge.s32.totalorder %s15, 4
      %s25 = sphi 0, %s27
      %s28 = sphi 0, %s25
      %s29 = sphi 0, %s28
      %s45 = sphi 0, %s29
      %s49 = sphi 0, %s49
      %s51 = sphi 0, %s49
      %s52 = sphi 0, %s51
      %s66 = sphi 0, %s52
      %s72 = sphi 0, %s74
      %s75 = sphi 0, %s72
      %s76 = sphi 0, %s75
      %s92 = sphi 0, %s76
    $region4: #{tpu_custom_call.1} parent=1 // loop_header_branch
      %18 = sbr.rel (%p16) target = $region8
    $region5: #{tpu_custom_call.1} parent=1 // loop_body
      %s20 = ssub.s32 %s15, 1
      %s21 = ssub.s32 %s15, 2
      %s22 = sadd.s32 %s15, 1
      %s23 = ssub.s32 %s15, %s22
      %p24 = scmp.eq.s32.totalorder %s23, 0
      %s26 = sadd.s32 %s25, 1
      %s27 = scalar_select %p24, %s25, %s26
      %p30 = pneg %p24
      %p31 = scmp.eq.s32.totalorder %s15, 1
      %p32 = por %p30, %p31
      %p33 = scmp.ne.s32.totalorder %s25, %s28
      %p34 = scmp.eq.s32.totalorder %s15, 0
      %p35 = por %p33, %p34
      %p36 = scmp.ne.s32.totalorder %s25, %s28
      %p37 = scmp.eq.s32.totalorder %s20, 1
      %p38 = por %p36, %p37
      %p39 = scmp.ne.s32.totalorder %s28, %s29
      %p40 = scmp.eq.s32.totalorder %s20, 0
      %p41 = por %p39, %p40
      %p42 = scmp.ne.s32.totalorder %s28, %s29
      %p43 = scmp.eq.s32.totalorder %s21, 1
      %p44 = por %p42, %p43
      %p46 = scmp.ne.s32.totalorder %s29, %s45
      %p47 = scmp.eq.s32.totalorder %s21, 0
      %p48 = por %p46, %p47
      %s50 = sadd.s32 %s49, 1
      %p53 = scmp.eq.s32.totalorder %s15, 1
      %p54 = scmp.ne.s32.totalorder %s49, %s51
      %p55 = scmp.eq.s32.totalorder %s15, 0
      %p56 = por %p54, %p55
      %p57 = scmp.ne.s32.totalorder %s49, %s51
      %p58 = scmp.eq.s32.totalorder %s20, 1
      %p59 = por %p57, %p58
      %p60 = scmp.ne.s32.totalorder %s51, %s52
      %p61 = scmp.eq.s32.totalorder %s20, 0
      %p62 = por %p60, %p61
      %p63 = scmp.ne.s32.totalorder %s51, %s52
      %p64 = scmp.eq.s32.totalorder %s21, 1
      %p65 = por %p63, %p64
      %p67 = scmp.ne.s32.totalorder %s52, %s66
      %p68 = scmp.eq.s32.totalorder %s21, 0
      %p69 = por %p67, %p68
      %s70 = ssub.s32 %s15, %s22
      %p71 = scmp.eq.s32.totalorder %s70, 0
      %s73 = sadd.s32 %s72, 1
      %s74 = scalar_select %p71, %s72, %s73
      %p77 = pneg %p71
      %p78 = scmp.eq.s32.totalorder %s15, 1
      %p79 = por %p77, %p78
      %p80 = scmp.ne.s32.totalorder %s72, %s75
      %p81 = scmp.eq.s32.totalorder %s15, 0
      %p82 = por %p80, %p81
      %p83 = scmp.ne.s32.totalorder %s72, %s75
      %p84 = scmp.eq.s32.totalorder %s20, 1
      %p85 = por %p83, %p84
      %p86 = scmp.ne.s32.totalorder %s75, %s76
      %p87 = scmp.eq.s32.totalorder %s20, 0
      %p88 = por %p86, %p87
      %p89 = scmp.ne.s32.totalorder %s75, %s76
      %p90 = scmp.eq.s32.totalorder %s21, 1
      %p91 = por %p89, %p90
      %p93 = scmp.ne.s32.totalorder %s76, %s92
      %p94 = scmp.eq.s32.totalorder %s21, 0
      %p95 = por %p93, %p94
      %p96 = scmp.le.s32.totalorder 1, %s15
      %p97 = scmp.lt.s32.totalorder %s15, 3
      %p98 = pnand %p96, %p97
      %p99 = pneg %p98
      // Predicated region
      $region9: #{tpu_custom_call.1} parent=5 // pred_check
        _
      $region10: #{tpu_custom_call.1} parent=5 // pred_check_branch
        %101 = sbr.rel (%p98) target = $region12
      $region11: #{tpu_custom_call.1} parent=5 // pred_region
        %s102 = ssub.s32 %s15, 1
        // Predicated region
        $region13: #{tpu_custom_call.1} parent=11 // pred_check
          %p103 = pneg %p62
        $region14: #{tpu_custom_call.1} parent=11 // pred_check_branch
          %105 = sbr.rel (%p103) target = $region16
        $region15: #{tpu_custom_call.1} parent=11 // pred_region
          %s107 = ssub.s32 2048, 2048
          %108 = vsyncadd [#allocation6], %s107
          %s109 = sshll.u32 [#allocation5], 4
          %s110 = int_to_ptr.vmem [resolvable:$true] %s109
          %115 = dma.hbm_to_vmem [thread:$0]  %s1, 2048, %s110, [#allocation6], 128, 128, 8
        $region16: #{tpu_custom_call.1} parent=11 // pred_fallthru
          _
      $region12: #{tpu_custom_call.1} parent=5 // pred_fallthru
        _
      %p116 = scmp.lt.s32.totalorder %s15, 2
      // Predicated region
      $region17: #{tpu_custom_call.1} parent=5 // pred_check
        %p117 = pneg %p116
      $region18: #{tpu_custom_call.1} parent=5 // pred_check_branch
        %119 = sbr.rel (%p117) target = $region20
      $region19: #{tpu_custom_call.1} parent=5 // pred_region
        // Predicated region
        $region21: #{tpu_custom_call.1} parent=19 // pred_check
          %p120 = pneg %p35
        $region22: #{tpu_custom_call.1} parent=19 // pred_check_branch
          %122 = sbr.rel (%p120) target = $region24
        $region23: #{tpu_custom_call.1} parent=19 // pred_region
          %s123 = sand.u32 %s25, 1
          %s124 = scalar_lea.sflag [#allocation3], %s123
          %s125 = sand.u32 %s25, 1
          %s126 = smul.addr %s125, 8
          %s127 = scalar_lea.vmem [#allocation2], %s126
          %s129 = ssub.s32 128, 128
          %130 = vsyncadd %s124, %s129
          %s131 = smul.addr %s15, 128
          %s132 = scalar_lea.hbm %s0, %s131
          %s134 = sshll.u32 %s127, 4
          %s135 = int_to_ptr.vmem [resolvable:$true] %s134
          %137 = dma.hbm_to_vmem [thread:$0]  %s132, 128, %s135, %s124
        $region24: #{tpu_custom_call.1} parent=19 // pred_fallthru
          _
      $region20: #{tpu_custom_call.1} parent=5 // pred_fallthru
        _
      %p138 = scmp.le.s32.totalorder 1, %s15
      %p139 = scmp.lt.s32.totalorder %s15, 3
      %p140 = pnand %p138, %p139
      %p141 = pneg %p140
      // Predicated region
      $region25: #{tpu_custom_call.1} parent=5 // pred_check
        _
      $region26: #{tpu_custom_call.1} parent=5 // pred_check_branch
        %143 = sbr.rel (%p140) target = $region28
      $region27: #{tpu_custom_call.1} parent=5 // pred_region
        %s144 = ssub.s32 %s15, 1
        %s145 = sand.u32 %s28, 1
        %s146 = scalar_lea.sflag [#allocation3], %s145
        %s147 = sand.u32 %s28, 1
        %s148 = smul.addr %s147, 8
        %s149 = scalar_lea.vmem [#allocation2], %s148
        // Predicated region
        $region29: #{tpu_custom_call.1} parent=27 // pred_check
          %p150 = pneg %p41
        $region30: #{tpu_custom_call.1} parent=27 // pred_check_branch
          %152 = sbr.rel (%p150) target = $region32
        $region31: #{tpu_custom_call.1} parent=27 // pred_region
          %153 = dma.done %s146, 128
        $region32: #{tpu_custom_call.1} parent=27 // pred_fallthru
          _
        // Predicated region
        $region33: #{tpu_custom_call.1} parent=27 // pred_check
          %p154 = pneg %p62
        $region34: #{tpu_custom_call.1} parent=27 // pred_check_branch
          %156 = sbr.rel (%p154) target = $region36
        $region35: #{tpu_custom_call.1} parent=27 // pred_region
          %157 = dma.done [#allocation6], 2048
        $region36: #{tpu_custom_call.1} parent=27 // pred_fallthru
          _
        %s158 = sand.u32 %s28, 1
        %s159 = scalar_lea.sflag [#allocation3], %s158
        %s160 = sand.u32 %s28, 1
        %s161 = smul.addr %s160, 8
        %s162 = scalar_lea.vmem [#allocation2], %s161
        %p163 = pneg %p41
        %p164 = pneg %p38
        %p165 = pneg %p62
        %p166 = pneg %p59
        %p167 = pneg %p88
        %p168 = pneg %p85
        %s169 = sand.u32 %s75, 1
        %s170 = scalar_lea.sflag [#allocation4], %s169
        %s171 = sand.u32 %s75, 1
        %s172 = smul.addr %s171, 8
        %s173 = scalar_lea.vmem [#allocation7], %s172
        %v174 = vld [vmem:[%s149] sm:$0xff]
        %v175 = vld [vmem:[#allocation5] sm:$0xff]
        %v176 = vld [vmem:[#allocation5 + $0x8] sm:$0xff]
        %v177 = vld [vmem:[#allocation5 + $0x10] sm:$0xff]
        %v178 = vld [vmem:[#allocation5 + $0x18] sm:$0xff]
        %v179 = vld [vmem:[#allocation5 + $0x20] sm:$0xff]
        %v180 = vld [vmem:[#allocation5 + $0x28] sm:$0xff]
        %v181 = vld [vmem:[#allocation5 + $0x30] sm:$0xff]
        %v182 = vld [vmem:[#allocation5 + $0x38] sm:$0xff]
        %v183 = vld [vmem:[#allocation5 + $0x40] sm:$0xff]
        %v184 = vld [vmem:[#allocation5 + $0x48] sm:$0xff]
        %v185 = vld [vmem:[#allocation5 + $0x50] sm:$0xff]
        %v186 = vld [vmem:[#allocation5 + $0x58] sm:$0xff]
        %v187 = vld [vmem:[#allocation5 + $0x60] sm:$0xff]
        %v188 = vld [vmem:[#allocation5 + $0x68] sm:$0xff]
        %v189 = vld [vmem:[#allocation5 + $0x70] sm:$0xff]
        %v190 = vld [vmem:[#allocation5 + $0x78] sm:$0xff]
        %191 = vmatprep.subr.mxu0 0.0
        %192 = vmatpush1.msra.mxu0 %v175
        %193 = vmatprep.subr.mxu0 0.0
        %194 = vmatpush1.msra.mxu0 %v176
        %195 = vmatprep.subr.mxu0 0.0
        %196 = vmatpush1.msra.mxu0 %v177
        %197 = vmatprep.subr.mxu0 0.0
        %198 = vmatpush1.msra.mxu0 %v178
        %199 = vmatprep.subr.mxu0 0.0
        %200 = vmatpush1.msra.mxu0 %v179
        %201 = vmatprep.subr.mxu0 0.0
        %202 = vmatpush1.msra.mxu0 %v180
        %203 = vmatprep.subr.mxu0 0.0
        %204 = vmatpush1.msra.mxu0 %v181
        %205 = vmatprep.subr.mxu0 0.0
        %206 = vmatpush1.msra.mxu0 %v182
        %207 = vmatprep.subr.mxu0 0.0
        %208 = vmatpush1.msra.mxu0 %v183
        %209 = vmatprep.subr.mxu0 0.0
        %210 = vmatpush1.msra.mxu0 %v184
        %211 = vmatprep.subr.mxu0 0.0
        %212 = vmatpush1.msra.mxu0 %v185
        %213 = vmatprep.subr.mxu0 0.0
        %214 = vmatpush1.msra.mxu0 %v186
        %215 = vmatprep.subr.mxu0 0.0
        %216 = vmatpush1.msra.mxu0 %v187
        %217 = vmatprep.subr.mxu0 0.0
        %218 = vmatpush1.msra.mxu0 %v188
        %219 = vmatprep.subr.mxu0 0.0
        %220 = vmatpush1.msra.mxu0 %v189
        %221 = vmatprep.subr.mxu0 0.0
        %222 = vmatpush1.msra.mxu0 %v190
        %223 = vmatprep.subr.mxu0 0.0
        %224 = vmatpush1.msra.mxu0 0.0
        %225 = vmatprep.subr.mxu0 0.0
        %226 = vmatpush1.msra.mxu0 0.0
        %227 = vmatprep.subr.mxu0 0.0
        %228 = vmatpush1.msra.mxu0 0.0
        %229 = vmatprep.subr.mxu0 0.0
        %230 = vmatpush1.msra.mxu0 0.0
        %231 = vmatprep.subr.mxu0 0.0
        %232 = vmatpush1.msra.mxu0 0.0
        %233 = vmatprep.subr.mxu0 0.0
        %234 = vmatpush1.msra.mxu0 0.0
        %235 = vmatprep.subr.mxu0 0.0
        %236 = vmatpush1.msra.mxu0 0.0
        %237 = vmatprep.subr.mxu0 0.0
        %238 = vmatpush1.msra.mxu0 0.0
        %239 = vmatprep.subr.mxu0 0.0
        %240 = vmatpush1.msra.mxu0 0.0
        %241 = vmatprep.subr.mxu0 0.0
        %242 = vmatpush1.msra.mxu0 0.0
        %243 = vmatprep.subr.mxu0 0.0
        %244 = vmatpush1.msra.mxu0 0.0
        %245 = vmatprep.subr.mxu0 0.0
        %246 = vmatpush1.msra.mxu0 0.0
        %247 = vmatprep.subr.mxu0 0.0
        %248 = vmatpush1.msra.mxu0 0.0
        %249 = vmatprep.subr.mxu0 0.0
        %250 = vmatpush1.msra.mxu0 0.0
        %251 = vmatprep.subr.mxu0 0.0
        %252 = vmatpush1.msra.mxu0 0.0
        %253 = vmatprep.subr.mxu0 0.0
        %254 = vmatpush1.msra.mxu0 0.0
        %255 = vmatprep.mubr.f32.mxu0 0.0
        %256 = vmatmul.mubr.f32.gmra.mrb[0].mxu0 %v174
        %v257 = vpop.f32.mrb[0].mxu0
        %v258 = vadd.f32 0.0, %v257
        %v259 = vpop.f32.mrb[0].mxu0
        %260 = vdwg.mxu0
        %261 = vst [vmem:[%s173] sm:$0xff] %v258
        %s262 = sand.u32 %s75, 1
        %s263 = scalar_lea.sflag [#allocation4], %s262
        %s264 = sand.u32 %s75, 1
        %s265 = smul.addr %s264, 8
        %s266 = scalar_lea.vmem [#allocation7], %s265
        // Predicated region
        $region37: #{tpu_custom_call.1} parent=27 // pred_check
          %p267 = pneg %p85
        $region38: #{tpu_custom_call.1} parent=27 // pred_check_branch
          %269 = sbr.rel (%p267) target = $region40
        $region39: #{tpu_custom_call.1} parent=27 // pred_region
          %s271 = ssub.s32 128, 128
          %272 = vsyncadd %s263, %s271
          %s273 = smul.addr %s20, 128
          %s274 = scalar_lea.hbm %s2, %s273
          %s276 = sshll.u32 %s266, 4
          %s277 = int_to_ptr.vmem [resolvable:$true] %s276
          %279 = dma.vmem_to_hbm [thread:$0]  %s277, 128, %s274, %s263
        $region40: #{tpu_custom_call.1} parent=27 // pred_fallthru
          _
      $region28: #{tpu_custom_call.1} parent=5 // pred_fallthru
        _
      %p280 = scmp.le.s32.totalorder 2, %s15
      // Predicated region
      $region41: #{tpu_custom_call.1} parent=5 // pred_check
        %p281 = pneg %p280
      $region42: #{tpu_custom_call.1} parent=5 // pred_check_branch
        %283 = sbr.rel (%p281) target = $region44
      $region43: #{tpu_custom_call.1} parent=5 // pred_region
        %s284 = ssub.s32 %s15, 2
        // Predicated region
        $region45: #{tpu_custom_call.1} parent=43 // pred_check
          %p285 = pneg %p91
        $region46: #{tpu_custom_call.1} parent=43 // pred_check_branch
          %287 = sbr.rel (%p285) target = $region48
        $region47: #{tpu_custom_call.1} parent=43 // pred_region
          %s288 = sand.u32 %s76, 1
          %s289 = scalar_lea.sflag [#allocation4], %s288
          %s290 = sand.u32 %s76, 1
          %s291 = smul.addr %s290, 8
          %s292 = scalar_lea.vmem [#allocation7], %s291
          %293 = dma.done %s289, 128
        $region48: #{tpu_custom_call.1} parent=43 // pred_fallthru
          _
      $region44: #{tpu_custom_call.1} parent=5 // pred_fallthru
        _
    $region6: #{tpu_custom_call.1} parent=1 // loop_footer
      %s19 = sadd.s32 1, %s15
    $region7: #{tpu_custom_call.1} parent=1 // loop_footer_branch
      %14 = sbr.rel target = $region3
    $region8: #{tpu_custom_call.1} parent=1 // loop_exit
      _
    %294 = vsyncpa [#allocation3], 1
    %s295 = scalar_lea.sflag [#allocation3], 1
    %296 = vsyncpa %s295, 1
    %297 = vsyncpa [#allocation6], 1
    %298 = vsyncpa [#allocation4], 1
    %s299 = scalar_lea.sflag [#allocation4], 1
    %300 = vsyncpa %s299, 1

// kernel: _mlp_forward.1
$region0: #{_mlp_forward.1}
  #allocation0 [shape = 'u32[]', space=smem, size = 0x4, offset = 0x4, fixed_abs, tag = 'smem constant byte address 0x4 - core index']
  #allocation1 [shape = 'u32[144,128]{1,0:T(1,128)}', space=vmem, size = 0x12000, scoped, tag = 'internal scratch']
  %s0 = inlined_call_operand.vmem [shape: f32[8,128], index: 0, kind: input, shape index: {}]
  %s1 = inlined_call_operand.vmem [shape: f32[8,1], index: 1, kind: input, shape index: {}]
  %s2 = inlined_call_operand.hbm [shape: f32[128,128], index: 2, kind: input, shape index: {}]
  %s3 = inlined_call_operand.vmem [shape: f32[1,128], index: 3, kind: input, shape index: {}]
  %s4 = inlined_call_operand.hbm [shape: f32[128,128], index: 4, kind: input, shape index: {}]
  %s5 = inlined_call_operand.vmem [shape: f32[1,128], index: 5, kind: input, shape index: {}]
  %s6 = inlined_call_operand.hbm [shape: f32[8,128], index: 6, kind: output, shape index: {}]
  %s7 = sld [smem:[#allocation0]]
  $region42: #{_mlp_forward.1} parent=0
    _
  %s9 = ssub.s32 1, %s7
  %s10 = scalar_select 0, %s9, %s7
  $region1: #{_mlp_forward.1} parent=0
    #allocation2 [shape = 'u8[65536]{0}', space=vmem, size = 0x10000, scoped, tag = 'input window, operand 2, single buffered']
    #allocation3 [shape = 's32[1]{0}', space=sflag, size = 0x4, scoped, tag = 'scoped memory for _mlp_forward.1']
    #allocation4 [shape = 's32[1]{0}', space=sflag, size = 0x4, scoped, tag = 'scoped memory for _mlp_forward.1']
    #allocation5 [shape = 'u8[65536]{0}', space=vmem, size = 0x10000, scoped, tag = 'input window, operand 4, single buffered']
    #allocation6 [shape = 's32[1]{0}', space=sflag, size = 0x4, scoped, tag = 'scoped memory for _mlp_forward.1']
    #allocation7 [shape = 'u8[4096]{0}', space=vmem, size = 0x1000, scoped, tag = 'output window, operand 0, single buffered']
    %11 = vsyncpa [#allocation3], 0
    %12 = vsyncpa [#allocation6], 0
    %13 = vsyncpa [#allocation4], 0
    // Predicated region
    $region2: #{_mlp_forward.1} parent=1 // pred_check
      _
    $region3: #{_mlp_forward.1} parent=1 // pred_check_branch
      %15 = sbr.rel (0) target = $region5
    $region4: #{_mlp_forward.1} parent=1 // pred_region
      _
    $region5: #{_mlp_forward.1} parent=1 // pred_fallthru
      _
    // Predicated region
    $region6: #{_mlp_forward.1} parent=1 // pred_check
      _
    $region7: #{_mlp_forward.1} parent=1 // pred_check_branch
      %17 = sbr.rel (0) target = $region9
    $region8: #{_mlp_forward.1} parent=1 // pred_region
      _
    $region9: #{_mlp_forward.1} parent=1 // pred_fallthru
      _
    // Predicated region
    $region10: #{_mlp_forward.1} parent=1 // pred_check
      _
    $region11: #{_mlp_forward.1} parent=1 // pred_check_branch
      %19 = sbr.rel (0) target = $region13
    $region12: #{_mlp_forward.1} parent=1 // pred_region
      %s21 = ssub.s32 2048, 2048
      %22 = vsyncadd [#allocation3], %s21
      %s23 = sshll.u32 [#allocation2], 4
      %s24 = int_to_ptr.vmem [resolvable:$true] %s23
      %29 = dma.hbm_to_vmem [thread:$0]  %s2, 2048, %s24, [#allocation3], 128, 128, 8
    $region13: #{_mlp_forward.1} parent=1 // pred_fallthru
      _
    // Predicated region
    $region14: #{_mlp_forward.1} parent=1 // pred_check
      _
    $region15: #{_mlp_forward.1} parent=1 // pred_check_branch
      %31 = sbr.rel (0) target = $region17
    $region16: #{_mlp_forward.1} parent=1 // pred_region
      _
    $region17: #{_mlp_forward.1} parent=1 // pred_fallthru
      _
    // Predicated region
    $region18: #{_mlp_forward.1} parent=1 // pred_check
      _
    $region19: #{_mlp_forward.1} parent=1 // pred_check_branch
      %33 = sbr.rel (0) target = $region21
    $region20: #{_mlp_forward.1} parent=1 // pred_region
      %s35 = ssub.s32 2048, 2048
      %36 = vsyncadd [#allocation6], %s35
      %s37 = sshll.u32 [#allocation5], 4
      %s38 = int_to_ptr.vmem [resolvable:$true] %s37
      %43 = dma.hbm_to_vmem [thread:$0]  %s4, 2048, %s38, [#allocation6], 128, 128, 8
    $region21: #{_mlp_forward.1} parent=1 // pred_fallthru
      _
    // Predicated region
    $region22: #{_mlp_forward.1} parent=1 // pred_check
      _
    $region23: #{_mlp_forward.1} parent=1 // pred_check_branch
      %45 = sbr.rel (0) target = $region25
    $region24: #{_mlp_forward.1} parent=1 // pred_region
      _
    $region25: #{_mlp_forward.1} parent=1 // pred_fallthru
      _
    // Predicated region
    $region26: #{_mlp_forward.1} parent=1 // pred_check
      _
    $region27: #{_mlp_forward.1} parent=1 // pred_check_branch
      %47 = sbr.rel (0) target = $region29
    $region28: #{_mlp_forward.1} parent=1 // pred_region
      %48 = dma.done [#allocation3], 2048
    $region29: #{_mlp_forward.1} parent=1 // pred_fallthru
      _
    // Predicated region
    $region30: #{_mlp_forward.1} parent=1 // pred_check
      _
    $region31: #{_mlp_forward.1} parent=1 // pred_check_branch
      %50 = sbr.rel (0) target = $region33
    $region32: #{_mlp_forward.1} parent=1 // pred_region
      %51 = dma.done [#allocation6], 2048
    $region33: #{_mlp_forward.1} parent=1 // pred_fallthru
      _
    %v52 = vld [vmem:[%s0] sm:$0xff]
    %v53 = vld [vmem:[%s1] sm:$0xff]
    %v54 = vld [vmem:[#allocation2] sm:$0xff]
    %v55 = vld [vmem:[#allocation2 + $0x8] sm:$0xff]
    %v56 = vld [vmem:[#allocation2 + $0x10] sm:$0xff]
    %v57 = vld [vmem:[#allocation2 + $0x18] sm:$0xff]
    %v58 = vld [vmem:[#allocation2 + $0x20] sm:$0xff]
    %v59 = vld [vmem:[#allocation2 + $0x28] sm:$0xff]
    %v60 = vld [vmem:[#allocation2 + $0x30] sm:$0xff]
    %v61 = vld [vmem:[#allocation2 + $0x38] sm:$0xff]
    %v62 = vld [vmem:[#allocation2 + $0x40] sm:$0xff]
    %v63 = vld [vmem:[#allocation2 + $0x48] sm:$0xff]
    %v64 = vld [vmem:[#allocation2 + $0x50] sm:$0xff]
    %v65 = vld [vmem:[#allocation2 + $0x58] sm:$0xff]
    %v66 = vld [vmem:[#allocation2 + $0x60] sm:$0xff]
    %v67 = vld [vmem:[#allocation2 + $0x68] sm:$0xff]
    %v68 = vld [vmem:[#allocation2 + $0x70] sm:$0xff]
    %v69 = vld [vmem:[#allocation2 + $0x78] sm:$0xff]
    %v70 = vld [vmem:[%s3] sm:$0x1]
    %v72 = vlaneseq
    %v73 = vshrl.u32 %v72, 7
    %v74 = vsub.s32 0, %v73
    %v75 = vrot.slane %v70, %v74
    %77 = vmatprep.subr.mxu0 0.0
    %78 = vmatpush1.msra.mxu0 %v54
    %79 = vmatprep.subr.mxu0 0.0
    %80 = vmatpush1.msra.mxu0 %v55
    %81 = vmatprep.subr.mxu0 0.0
    %82 = vmatpush1.msra.mxu0 %v56
    %83 = vmatprep.subr.mxu0 0.0
    %84 = vmatpush1.msra.mxu0 %v57
    %85 = vmatprep.subr.mxu0 0.0
    %86 = vmatpush1.msra.mxu0 %v58
    %87 = vmatprep.subr.mxu0 0.0
    %88 = vmatpush1.msra.mxu0 %v59
    %89 = vmatprep.subr.mxu0 0.0
    %90 = vmatpush1.msra.mxu0 %v60
    %91 = vmatprep.subr.mxu0 0.0
    %92 = vmatpush1.msra.mxu0 %v61
    %93 = vmatprep.subr.mxu0 0.0
    %94 = vmatpush1.msra.mxu0 %v62
    %95 = vmatprep.subr.mxu0 0.0
    %96 = vmatpush1.msra.mxu0 %v63
    %97 = vmatprep.subr.mxu0 0.0
    %98 = vmatpush1.msra.mxu0 %v64
    %99 = vmatprep.subr.mxu0 0.0
    %100 = vmatpush1.msra.mxu0 %v65
    %101 = vmatprep.subr.mxu0 0.0
    %102 = vmatpush1.msra.mxu0 %v66
    %103 = vmatprep.subr.mxu0 0.0
    %104 = vmatpush1.msra.mxu0 %v67
    %105 = vmatprep.subr.mxu0 0.0
    %106 = vmatpush1.msra.mxu0 %v68
    %107 = vmatprep.subr.mxu0 0.0
    %108 = vmatpush1.msra.mxu0 %v69
    %109 = vmatprep.subr.mxu0 0.0
    %110 = vmatpush1.msra.mxu0 0.0
    %111 = vmatprep.subr.mxu0 0.0
    %112 = vmatpush1.msra.mxu0 0.0
    %113 = vmatprep.subr.mxu0 0.0
    %114 = vmatpush1.msra.mxu0 0.0
    %115 = vmatprep.subr.mxu0 0.0
    %116 = vmatpush1.msra.mxu0 0.0
    %117 = vmatprep.subr.mxu0 0.0
    %118 = vmatpush1.msra.mxu0 0.0
    %119 = vmatprep.subr.mxu0 0.0
    %120 = vmatpush1.msra.mxu0 0.0
    %121 = vmatprep.subr.mxu0 0.0
    %122 = vmatpush1.msra.mxu0 0.0
    %123 = vmatprep.subr.mxu0 0.0
    %124 = vmatpush1.msra.mxu0 0.0
    %125 = vmatprep.subr.mxu0 0.0
    %126 = vmatpush1.msra.mxu0 0.0
    %127 = vmatprep.subr.mxu0 0.0
    %128 = vmatpush1.msra.mxu0 0.0
    %129 = vmatprep.subr.mxu0 0.0
    %130 = vmatpush1.msra.mxu0 0.0
    %131 = vmatprep.subr.mxu0 0.0
    %132 = vmatpush1.msra.mxu0 0.0
    %133 = vmatprep.subr.mxu0 0.0
    %134 = vmatpush1.msra.mxu0 0.0
    %135 = vmatprep.subr.mxu0 0.0
    %136 = vmatpush1.msra.mxu0 0.0
    %137 = vmatprep.subr.mxu0 0.0
    %138 = vmatpush1.msra.mxu0 0.0
    %139 = vmatprep.subr.mxu0 0.0
    %140 = vmatpush1.msra.mxu0 0.0
    %141 = vmatprep.mubr.f32.mxu0 0.0
    %142 = vmatmul.mubr.f32.gmra.mrb[0].mxu0 %v52
    %v143 = vpop.f32.mrb[0].mxu0
    %v144 = vadd.f32 %v75, %v143
    %v145 = vpop.f32.mrb[0].mxu0
    %146 = vdwg.mxu0
    %148 = vset.pattern.permute.xlu0 0
    %149 = vperm.xlu0 %148, %v53
    %v150 = vpop.permute.xlu0 %149
    %v152 = vmul.f32 %v144, %v150
    %v153 = vmax.f32 %v152, 0.0
    %v154 = vld [vmem:[#allocation5] sm:$0xff]
    %v155 = vld [vmem:[#allocation5 + $0x8] sm:$0xff]
    %v156 = vld [vmem:[#allocation5 + $0x10] sm:$0xff]
    %v157 = vld [vmem:[#allocation5 + $0x18] sm:$0xff]
    %v158 = vld [vmem:[#allocation5 + $0x20] sm:$0xff]
    %v159 = vld [vmem:[#allocation5 + $0x28] sm:$0xff]
    %v160 = vld [vmem:[#allocation5 + $0x30] sm:$0xff]
    %v161 = vld [vmem:[#allocation5 + $0x38] sm:$0xff]
    %v162 = vld [vmem:[#allocation5 + $0x40] sm:$0xff]
    %v163 = vld [vmem:[#allocation5 + $0x48] sm:$0xff]
    %v164 = vld [vmem:[#allocation5 + $0x50] sm:$0xff]
    %v165 = vld [vmem:[#allocation5 + $0x58] sm:$0xff]
    %v166 = vld [vmem:[#allocation5 + $0x60] sm:$0xff]
    %v167 = vld [vmem:[#allocation5 + $0x68] sm:$0xff]
    %v168 = vld [vmem:[#allocation5 + $0x70] sm:$0xff]
    %v169 = vld [vmem:[#allocation5 + $0x78] sm:$0xff]
    %v170 = vld [vmem:[%s5] sm:$0x1]
    %v172 = vlaneseq
    %v173 = vshrl.u32 %v172, 7
    %v174 = vsub.s32 0, %v173
    %v175 = vrot.slane %v170, %v174
    %177 = vmatprep.subr.mxu0 0.0
    %178 = vmatpush1.msra.mxu0 %v154
    %179 = vmatprep.subr.mxu0 0.0
    %180 = vmatpush1.msra.mxu0 %v155
    %181 = vmatprep.subr.mxu0 0.0
    %182 = vmatpush1.msra.mxu0 %v156
    %183 = vmatprep.subr.mxu0 0.0
    %184 = vmatpush1.msra.mxu0 %v157
    %185 = vmatprep.subr.mxu0 0.0
    %186 = vmatpush1.msra.mxu0 %v158
    %187 = vmatprep.subr.mxu0 0.0
    %188 = vmatpush1.msra.mxu0 %v159
    %189 = vmatprep.subr.mxu0 0.0
    %190 = vmatpush1.msra.mxu0 %v160
    %191 = vmatprep.subr.mxu0 0.0
    %192 = vmatpush1.msra.mxu0 %v161
    %193 = vmatprep.subr.mxu0 0.0
    %194 = vmatpush1.msra.mxu0 %v162
    %195 = vmatprep.subr.mxu0 0.0
    %196 = vmatpush1.msra.mxu0 %v163
    %197 = vmatprep.subr.mxu0 0.0
    %198 = vmatpush1.msra.mxu0 %v164
    %199 = vmatprep.subr.mxu0 0.0
    %200 = vmatpush1.msra.mxu0 %v165
    %201 = vmatprep.subr.mxu0 0.0
    %202 = vmatpush1.msra.mxu0 %v166
    %203 = vmatprep.subr.mxu0 0.0
    %204 = vmatpush1.msra.mxu0 %v167
    %205 = vmatprep.subr.mxu0 0.0
    %206 = vmatpush1.msra.mxu0 %v168
    %207 = vmatprep.subr.mxu0 0.0
    %208 = vmatpush1.msra.mxu0 %v169
    %209 = vmatprep.subr.mxu0 0.0
    %210 = vmatpush1.msra.mxu0 0.0
    %211 = vmatprep.subr.mxu0 0.0
    %212 = vmatpush1.msra.mxu0 0.0
    %213 = vmatprep.subr.mxu0 0.0
    %214 = vmatpush1.msra.mxu0 0.0
    %215 = vmatprep.subr.mxu0 0.0
    %216 = vmatpush1.msra.mxu0 0.0
    %217 = vmatprep.subr.mxu0 0.0
    %218 = vmatpush1.msra.mxu0 0.0
    %219 = vmatprep.subr.mxu0 0.0
    %220 = vmatpush1.msra.mxu0 0.0
    %221 = vmatprep.subr.mxu0 0.0
    %222 = vmatpush1.msra.mxu0 0.0
    %223 = vmatprep.subr.mxu0 0.0
    %224 = vmatpush1.msra.mxu0 0.0
    %225 = vmatprep.subr.mxu0 0.0
    %226 = vmatpush1.msra.mxu0 0.0
    %227 = vmatprep.subr.mxu0 0.0
    %228 = vmatpush1.msra.mxu0 0.0
    %229 = vmatprep.subr.mxu0 0.0
    %230 = vmatpush1.msra.mxu0 0.0
    %231 = vmatprep.subr.mxu0 0.0
    %232 = vmatpush1.msra.mxu0 0.0
    %233 = vmatprep.subr.mxu0 0.0
    %234 = vmatpush1.msra.mxu0 0.0
    %235 = vmatprep.subr.mxu0 0.0
    %236 = vmatpush1.msra.mxu0 0.0
    %237 = vmatprep.subr.mxu0 0.0
    %238 = vmatpush1.msra.mxu0 0.0
    %239 = vmatprep.subr.mxu0 0.0
    %240 = vmatpush1.msra.mxu0 0.0
    %241 = vmatprep.mubr.f32.mxu0 0.0
    %242 = vmatmul.mubr.f32.gmra.mrb[0].mxu0 %v153
    %v243 = vpop.f32.mrb[0].mxu0
    %v244 = vadd.f32 %v175, %v243
    %v245 = vpop.f32.mrb[0].mxu0
    %246 = vdwg.mxu0
    %v247 = vmul.f32 %v244, %v150
    %v248 = vmax.f32 %v247, 0.0
    %249 = vst [vmem:[#allocation7] sm:$0xff] %v248
    // Predicated region
    $region34: #{_mlp_forward.1} parent=1 // pred_check
      _
    $region35: #{_mlp_forward.1} parent=1 // pred_check_branch
      %251 = sbr.rel (0) target = $region37
    $region36: #{_mlp_forward.1} parent=1 // pred_region
      %s253 = ssub.s32 128, 128
      %254 = vsyncadd [#allocation4], %s253
      %s256 = sshll.u32 [#allocation7], 4
      %s257 = int_to_ptr.vmem [resolvable:$true] %s256
      %259 = dma.vmem_to_hbm [thread:$0]  %s257, 128, %s6, [#allocation4]
    $region37: #{_mlp_forward.1} parent=1 // pred_fallthru
      _
    // Predicated region
    $region38: #{_mlp_forward.1} parent=1 // pred_check
      _
    $region39: #{_mlp_forward.1} parent=1 // pred_check_branch
      %261 = sbr.rel (0) target = $region41
    $region40: #{_mlp_forward.1} parent=1 // pred_region
      %262 = dma.done [#allocation4], 128
    $region41: #{_mlp_forward.1} parent=1 // pred_fallthru
      _
    %263 = vsyncpa [#allocation3], 1
    %264 = vsyncpa [#allocation6], 1
    %265 = vsyncpa [#allocation4], 1

</llo_original>
